<compile_context>
chip_gen: v7x
topology: tpu7x:2x2x1
jax: 0.10.0
libtpu: 0.0.40
codegen_flags: <defaults>
</compile_context>

<pallas_src>
import functools

import jax
import jax.numpy as jnp
from jax.experimental import pallas as pl
from jax.experimental.pallas import tpu as pltpu

BN_EPS = 1e-5
LANE = 128
SUBLANE = 8
ROW_TILE_TARGET = 2048              # rows of 128 f32 lanes per step (1 MiB / channel)
STEP_BYTES_CAP = 4 * 1024 * 1024    # per-step (in+out) block bytes -> ~8 MiB double-buffered
FUSED_BYTES_CAP = 8 * 1024 * 1024   # single-pass path: whole (in+out) resident in VMEM
VMEM_LIMIT = 32 * 1024 * 1024       # fits v5e/v6e/v7x scoped-VMEM comfortably


def _round_up(a, b):
    return (a + b - 1) // b * b


def _cdiv(a, b):
    return -(-a // b)


# --------------------------------------------------------------------------------------
# Pass 1 (tiled path): per-lane partial input moments, accumulated into a resident block.
# --------------------------------------------------------------------------------------
def _stats_kernel(x_ref, acc_ref, *, cin):
    # x_ref:   (1, Cin, TR, 128) VMEM
    # acc_ref: (1, n_stats, 8, 128) VMEM, resident across grid axis 1 (row blocks).
    #          rows [0, Cin)        = per-channel per-lane sum(x)
    #          rows [Cin, n_stats)  = upper-triangular Gram per-lane sum(x_ci * x_cj)
    @pl.when(pl.program_id(1) == 0)
    def _():
        acc_ref[...] = jnp.zeros_like(acc_ref)

    x = x_ref[0].astype(jnp.float32)                       # (Cin, TR, 128)
    tr = x.shape[1]
    xb = x.reshape(cin, tr // SUBLANE, SUBLANE, LANE)      # vreg-aligned view (free)

    idx = 0
    for ci in range(cin):
        acc_ref[0, idx] += jnp.sum(xb[ci], axis=0)         # pure VPU adds -> (8, 128)
        idx += 1
    for ci in range(cin):
        for cj in range(ci, cin):
            acc_ref[0, idx] += jnp.sum(xb[ci] * xb[cj], axis=0)
            idx += 1


# --------------------------------------------------------------------------------------
# Pass 2 (tiled path): y = relu(x @ w_eff + b_eff), BN affine folded into the conv weight.
# --------------------------------------------------------------------------------------
def _norm_relu_kernel(x_ref, w_ref, b_ref, o_ref, *, cin, cout):
    # x_ref: (1, Cin, TR, 128) VMEM; w_ref: (Cin, Cout) SMEM; b_ref: (Cout,) SMEM
    # o_ref: (1, Cout, TR, 128) VMEM (lane-dense output).
    x = x_ref[0].astype(jnp.float32)                       # (Cin, TR, 128)
    for co in range(cout):
        # TODO(synk): for Cin*Cout >~ 64 replace this VPU broadcast-MAC loop with an
        #             MXU jnp.dot (channels on the sublane axis).
        t = x[0] * w_ref[0, co]
        for ci in range(1, cin):
            t = t + x[ci] * w_ref[ci, co]
        t = t + b_ref[co]
        o_ref[0, co] = jnp.maximum(t, 0.0).astype(o_ref.dtype)


# --------------------------------------------------------------------------------------
# Single-pass fused path: whole cropped activation resident in VMEM (read x once).
# --------------------------------------------------------------------------------------
def _fused_kernel(x_ref, w_ref, gamma_ref, beta_ref, o_ref, *, cin, cout, inv_cnt):
    # x_ref: (N, Cin, R, 128) VMEM; w_ref: (Cin, Cout) SMEM; gamma/beta: (Cout,) SMEM
    # o_ref: (N, Cout, R, 128) VMEM.
    x = x_ref[...].astype(jnp.float32)

    def lane_partial(v):                                   # (N, R, 128) -> (8, 128), VPU only
        return jnp.sum(v.reshape(-1, SUBLANE, LANE), axis=0)

    def scalar_sum(v):                                     # (N, R, 128) -> (1, 1)
        return jnp.sum(lane_partial(v), axis=(0, 1), keepdims=True)

    xs = [x[:, ci] for ci in range(cin)]                   # each (N, R, 128)
    s_x = [scalar_sum(xs[ci]) for ci in range(cin)]
    gram = {}
    for ci in range(cin):
        for cj in range(ci, cin):
            gram[(ci, cj)] = scalar_sum(xs[ci] * xs[cj])

    for co in range(cout):
        # Output moments derived analytically from input moments:
        #   sum(t_co)   = sum_ci W[ci,co] * sum(x_ci)
        #   sum(t_co^2) = sum_{ci,cj} W[ci,co] W[cj,co] * Gram[ci,cj]
        s_t = w_ref[0, co] * s_x[0]
        for ci in range(1, cin):
            s_t = s_t + w_ref[ci, co] * s_x[ci]
        ss_t = None
        for ci in range(cin):
            for cj in range(cin):
                g = gram[(min(ci, cj), max(ci, cj))]
                term = (w_ref[ci, co] * w_ref[cj, co]) * g
                ss_t = term if ss_t is None else ss_t + term

        mean = s_t * inv_cnt                               # (1, 1)
        var = jnp.maximum(ss_t * inv_cnt - mean * mean, 0.0)   # biased var (BN training)
        a = gamma_ref[co] * jax.lax.rsqrt(var + BN_EPS)    # (1, 1)
        b = beta_ref[co] - mean * a                        # (1, 1)

        acc = (w_ref[0, co] * a) * xs[0]
        for ci in range(1, cin):
            acc = acc + (w_ref[ci, co] * a) * xs[ci]
        y = jnp.maximum(acc + b, 0.0)                      # (N, R, 128)
        o_ref[:, co:co + 1, :, :] = y[:, None, :, :].astype(o_ref.dtype)


# --------------------------------------------------------------------------------------
# Wrapper
# --------------------------------------------------------------------------------------
@functools.partial(jax.jit,
                   static_argnames=("stride", "padding", "force_two_pass", "row_tile"))
def m2_forward(x, w_t, gamma, beta, *, stride=1, padding=1,
               force_two_pass=False, row_tile=None):
    """x: (N, Cin, H, W); w_t: (Cin, Cout, 1, 1) ConvTranspose2d weight; gamma/beta: (Cout,)."""
    N, Cin, H, W = x.shape
    Cin_w, Cout, kH, kW = w_t.shape
    assert Cin_w == Cin
    # TODO(synk): only the module's kernel_size=1, stride=1 configuration is implemented.
    assert kH == 1 and kW == 1 and stride == 1

    Ho = (H - 1) * stride - 2 * padding + kH
    Wo = (W - 1) * stride - 2 * padding + kW
    assert Ho > 0 and Wo > 0, "padding too large for input"
    S = Ho * Wo
    R = _cdiv(S, LANE)

    # Row-tile selection: MiB-scale blocks, sublane-aligned, capped for v7x VMEM.
    if row_tile is not None:
        TR = max(SUBLANE, (row_tile // SUBLANE) * SUBLANE)
    else:
        bytes_per_row = (Cin + Cout) * LANE * 4
        TR = min(ROW_TILE_TARGET,
                 max(SUBLANE, (STEP_BYTES_CAP // bytes_per_row) // SUBLANE * SUBLANE))
    if R <= TR:
        TR = _round_up(R, SUBLANE)
    R_pad = _round_up(R, TR)

    # ConvTranspose2d(k=1, s=1, p): crop the border, then flatten spatial into a
    # lane-dense (rows, 128) layout (reshape + zero pad only — no transpose).
    # Zero padding contributes 0 to all accumulated moments, so stats stay exact.
    # TODO(synk): the crop/pad materializes x once; could be folded into the index_map
    #             with an in-kernel ragged-tail mask to save that HBM round trip.
    x_crop = x[:, :, padding:padding + Ho, padding:padding + Wo]
    x_flat = x_crop.reshape(N, Cin, S)
    if R_pad * LANE != S:
        x_flat = jnp.pad(x_flat, ((0, 0), (0, 0), (0, R_pad * LANE - S)))
    x_blk = x_flat.reshape(N, Cin, R_pad, LANE)

    w2d = w_t.reshape(Cin, Cout).astype(jnp.float32)
    gamma32 = gamma.astype(jnp.float32)
    beta32 = beta.astype(jnp.float32)
    inv_cnt = 1.0 / float(N * S)

    total_bytes = (Cin + Cout) * N * R_pad * LANE * 4
    use_fused = (not force_two_pass) and total_bytes <= FUSED_BYTES_CAP

    if use_fused:
        # ---- Single pass: stats + normalize + ReLU; x read from HBM exactly once. ----
        out_blk = pl.pallas_call(
            functools.partial(_fused_kernel, cin=Cin, cout=Cout, inv_cnt=inv_cnt),
            out_shape=jax.ShapeDtypeStruct((N, Cout, R_pad, LANE), x.dtype),
            in_specs=[
                pl.BlockSpec(memory_space=pltpu.MemorySpace.VMEM),
                pl.BlockSpec(memory_space=pltpu.MemorySpace.SMEM),
                pl.BlockSpec(memory_space=pltpu.MemorySpace.SMEM),
                pl.BlockSpec(memory_space=pltpu.MemorySpace.SMEM),
            ],
            out_specs=pl.BlockSpec(memory_space=pltpu.MemorySpace.VMEM),
            compiler_params=pltpu.CompilerParams(vmem_limit_bytes=VMEM_LIMIT),
        )(x_blk, w2d, gamma32, beta32)
    else:
        # ---- Pass 1: per-batch partial input moments (parallel over N, reduce over rows). ----
        n_stats = Cin + Cin * (Cin + 1) // 2
        grid = (N, R_pad // TR)
        stats = pl.pallas_call(
            functools.partial(_stats_kernel, cin=Cin),
            out_shape=jax.ShapeDtypeStruct((N, n_stats, SUBLANE, LANE), jnp.float32),
            grid=grid,
            in_specs=[pl.BlockSpec((1, Cin, TR, LANE), lambda n, r: (n, 0, r, 0))],
            out_specs=pl.BlockSpec((1, n_stats, SUBLANE, LANE), lambda n, r: (n, 0, 0, 0)),
            compiler_params=pltpu.CompilerParams(
                dimension_semantics=("parallel", "arbitrary"),
                vmem_limit_bytes=VMEM_LIMIT),
        )(x_blk)

        # ---- Finalize (tiny O(Cin^2 * Cout) work in JAX): input moments -> BN scale/shift. ----
        acc = jnp.sum(stats, axis=(0, 2, 3))               # (n_stats,)
        s_x = acc[:Cin]
        gram = jnp.zeros((Cin, Cin), jnp.float32)
        k = Cin
        for ci in range(Cin):
            for cj in range(ci, Cin):
                gram = gram.at[ci, cj].set(acc[k])
                if cj != ci:
                    gram = gram.at[cj, ci].set(acc[k])
                k += 1
        sum_t = w2d.T @ s_x                                 # (Cout,)
        sumsq_t = jnp.einsum("ic,jc,ij->c", w2d, w2d, gram)
        mean = sum_t * inv_cnt
        # TODO(synk): E[t^2]-E[t]^2 in f32 can cancel for very large N*S; a centered
        #             second pass would be more robust at extreme sizes.
        var = jnp.maximum(sumsq_t * inv_cnt - mean * mean, 0.0)
        a = gamma32 * jax.lax.rsqrt(var + BN_EPS)
        w_eff = w2d * a[None, :]                            # (Cin, Cout)
        b_eff = beta32 - mean * a                           # (Cout,)

        # ---- Pass 2: fused (conv*scale) + shift + ReLU; megacore-parallel. ----
        out_blk = pl.pallas_call(
            functools.partial(_norm_relu_kernel, cin=Cin, cout=Cout),
            out_shape=jax.ShapeDtypeStruct((N, Cout, R_pad, LANE), x.dtype),
            grid=grid,
            in_specs=[
                pl.BlockSpec((1, Cin, TR, LANE), lambda n, r: (n, 0, r, 0)),
                pl.BlockSpec(memory_space=pltpu.MemorySpace.SMEM),
                pl.BlockSpec(memory_space=pltpu.MemorySpace.SMEM),
            ],
            out_specs=pl.BlockSpec((1, Cout, TR, LANE), lambda n, r: (n, 0, r, 0)),
            compiler_params=pltpu.CompilerParams(
                dimension_semantics=("parallel", "parallel"),
                vmem_limit_bytes=VMEM_LIMIT),
        )(x_blk, w_eff, b_eff)

    # Strip lane padding and restore (N, Cout, Ho, Wo). Reshape/slice only — no transpose.
    return out_blk.reshape(N, Cout, R_pad * LANE)[:, :, :S].reshape(N, Cout, Ho, Wo)


def m2_reference(x, w_t, gamma, beta, *, stride=1, padding=1):
    """Pure-JAX reference for the module's forward pass."""
    N, Cin, H, W = x.shape
    Cout, kH, kW = w_t.shape[1], w_t.shape[2], w_t.shape[3]
    Ho = (H - 1) * stride - 2 * padding + kH
    Wo = (W - 1) * stride - 2 * padding + kW
    x_crop = x[:, :, padding:padding + Ho, padding:padding + Wo]
    t = jnp.einsum("nihw,io->nohw", x_crop, w_t[:, :, 0, 0])
    mean = jnp.mean(t, axis=(0, 2, 3), keepdims=True)
    var = jnp.mean((t - mean) ** 2, axis=(0, 2, 3), keepdims=True)
    y = (t - mean) * jax.lax.rsqrt(var + BN_EPS)
    y = y * gamma.reshape(1, Cout, 1, 1) + beta.reshape(1, Cout, 1, 1)
    return jnp.maximum(y, 0.0)


if __name__ == "__main__":
    # Module hyper-params from the PyTorch script.
    in_channels, out_channels, kernel_size, stride, padding = 1, 1, 1, 1, 1

    key = jax.random.PRNGKey(0)
    kx, kw, kg, kb = jax.random.split(key, 4)

    # Small input consistent with the module's in_channels; spatial 8x8 like x1.
    x = jax.random.normal(kx, (2, in_channels, 8, 8), dtype=jnp.float32)
    # ConvTranspose2d weight layout: [Cin, Cout, kH, kW], no bias.
    w_t = jax.random.normal(kw, (in_channels, out_channels, kernel_size, kernel_size),
                            dtype=jnp.float32) * 0.5
    gamma = 0.5 + jax.random.uniform(kg, (out_channels,), dtype=jnp.float32)
    beta = 0.1 * jax.random.normal(kb, (out_channels,), dtype=jnp.float32)

    ref = m2_reference(x, w_t, gamma, beta, stride=stride, padding=padding)

    # Single-pass fused path (cropped activation fits in VMEM).
    out = m2_forward(x, w_t, gamma, beta, stride=stride, padding=padding)
    jax.block_until_ready(out)
    assert out.shape == (2, out_channels, 6, 6), out.shape      # (H-1)*s - 2p + k = H-2
    assert bool(jnp.all(out >= 0.0))
    assert bool(jnp.allclose(out, ref, atol=1e-4, rtol=1e-4)), "fused path mismatch"

    # Tiled two-pass path: exercises the multi-block grid reduction of the stats pass.
    x2 = jax.random.normal(kx, (2, in_channels, 50, 50), dtype=jnp.float32)
    ref2 = m2_reference(x2, w_t, gamma, beta, stride=stride, padding=padding)
    out2 = m2_forward(x2, w_t, gamma, beta, stride=stride, padding=padding,
                      force_two_pass=True, row_tile=8)
    jax.block_until_ready(out2)
    assert out2.shape == ref2.shape
    assert bool(jnp.allclose(out2, ref2, atol=1e-4, rtol=1e-4)), "tiled path mismatch"

    print("KERNEL_OK")
</pallas_src>

<mosaic_0001>
module attributes {stable_mosaic.version = 11 : i64} {
  func.func @_fused_kernel(%arg0: memref<2x1x8x128xf32, #tpu.memory_space<vmem>>, %arg1: memref<1x1xf32, #tpu.memory_space<smem>>, %arg2: memref<1xf32, #tpu.memory_space<smem>>, %arg3: memref<1xf32, #tpu.memory_space<smem>>, %arg4: memref<2x1x8x128xf32, #tpu.memory_space<vmem>>) attributes {dimension_semantics = [], scalar_prefetch = 0 : i64, scratch_operands = 0 : i64, tpu.core_type = #tpu.core_type<tc>} {
    %c0 = arith.constant 0 : index
    %c0_0 = arith.constant 0 : index
    %c0_1 = arith.constant 0 : index
    %c0_2 = arith.constant 0 : index
    %0 = vector.load %arg0[%c0, %c0_0, %c0_1, %c0_2] : memref<2x1x8x128xf32, #tpu.memory_space<vmem>>, vector<2x1x8x128xf32>
    %1 = vector.shape_cast %0 : vector<2x1x8x128xf32> to vector<2x8x128xf32>
    %cst = arith.constant dense<0.000000e+00> : vector<8x128xf32>
    %2 = vector.multi_reduction <add>, %1, %cst [0] : vector<2x8x128xf32> to vector<8x128xf32>
    %3 = vector.shape_cast %2 : vector<8x128xf32> to vector<1x8x128xf32>
    %cst_3 = arith.constant dense<0.000000e+00> : vector<1xf32>
    %4 = vector.multi_reduction <add>, %3, %cst_3 [1, 2] : vector<1x8x128xf32> to vector<1xf32>
    %5 = vector.shape_cast %4 : vector<1xf32> to vector<1x1x1xf32>
    %6 = vector.extract %5[0, 0, 0] : f32 from vector<1x1x1xf32>
    %7 = vector.broadcast %6 : f32 to vector<1x1xf32>
    %8 = arith.mulf %1, %1 : vector<2x8x128xf32>
    %cst_4 = arith.constant dense<0.000000e+00> : vector<8x128xf32>
    %9 = vector.multi_reduction <add>, %8, %cst_4 [0] : vector<2x8x128xf32> to vector<8x128xf32>
    %10 = vector.shape_cast %9 : vector<8x128xf32> to vector<1x8x128xf32>
    %cst_5 = arith.constant dense<0.000000e+00> : vector<1xf32>
    %11 = vector.multi_reduction <add>, %10, %cst_5 [1, 2] : vector<1x8x128xf32> to vector<1xf32>
    %12 = vector.shape_cast %11 : vector<1xf32> to vector<1x1x1xf32>
    %13 = vector.extract %12[0, 0, 0] : f32 from vector<1x1x1xf32>
    %14 = vector.broadcast %13 : f32 to vector<1x1xf32>
    %c0_6 = arith.constant 0 : index
    %c0_7 = arith.constant 0 : index
    %15 = memref.load %arg1[%c0_6, %c0_7] : memref<1x1xf32, #tpu.memory_space<smem>>
    %16 = vector.broadcast %15 : f32 to vector<1x1xf32>
    %17 = arith.mulf %16, %7 : vector<1x1xf32>
    %c0_8 = arith.constant 0 : index
    %c0_9 = arith.constant 0 : index
    %18 = memref.load %arg1[%c0_8, %c0_9] : memref<1x1xf32, #tpu.memory_space<smem>>
    %c0_10 = arith.constant 0 : index
    %c0_11 = arith.constant 0 : index
    %19 = memref.load %arg1[%c0_10, %c0_11] : memref<1x1xf32, #tpu.memory_space<smem>>
    %20 = arith.mulf %18, %19 : f32
    %21 = vector.broadcast %20 : f32 to vector<1x1xf32>
    %22 = arith.mulf %21, %14 : vector<1x1xf32>
    %cst_12 = arith.constant 0.013888889 : f32
    %23 = vector.broadcast %cst_12 : f32 to vector<1x1xf32>
    %24 = arith.mulf %17, %23 : vector<1x1xf32>
    %cst_13 = arith.constant 0.013888889 : f32
    %25 = vector.broadcast %cst_13 : f32 to vector<1x1xf32>
    %26 = arith.mulf %22, %25 : vector<1x1xf32>
    %27 = arith.mulf %24, %24 : vector<1x1xf32>
    %28 = arith.subf %26, %27 : vector<1x1xf32>
    %cst_14 = arith.constant 0.000000e+00 : f32
    %29 = vector.broadcast %cst_14 : f32 to vector<1x1xf32>
    %30 = arith.maximumf %28, %29 : vector<1x1xf32>
    %c0_15 = arith.constant 0 : index
    %31 = memref.load %arg2[%c0_15] : memref<1xf32, #tpu.memory_space<smem>>
    %cst_16 = arith.constant 9.99999974E-6 : f32
    %32 = vector.broadcast %cst_16 : f32 to vector<1x1xf32>
    %33 = arith.addf %30, %32 : vector<1x1xf32>
    %34 = math.rsqrt %33 : vector<1x1xf32>
    %35 = vector.broadcast %31 : f32 to vector<1x1xf32>
    %36 = arith.mulf %35, %34 : vector<1x1xf32>
    %c0_17 = arith.constant 0 : index
    %37 = memref.load %arg3[%c0_17] : memref<1xf32, #tpu.memory_space<smem>>
    %38 = arith.mulf %24, %36 : vector<1x1xf32>
    %39 = vector.broadcast %37 : f32 to vector<1x1xf32>
    %40 = arith.subf %39, %38 : vector<1x1xf32>
    %c0_18 = arith.constant 0 : index
    %c0_19 = arith.constant 0 : index
    %41 = memref.load %arg1[%c0_18, %c0_19] : memref<1x1xf32, #tpu.memory_space<smem>>
    %42 = vector.broadcast %41 : f32 to vector<1x1xf32>
    %43 = arith.mulf %42, %36 : vector<1x1xf32>
    %44 = vector.shape_cast %43 : vector<1x1xf32> to vector<1x1x1xf32>
    %45 = vector.broadcast %44 : vector<1x1x1xf32> to vector<2x8x128xf32>
    %46 = arith.mulf %45, %1 : vector<2x8x128xf32>
    %47 = vector.shape_cast %40 : vector<1x1xf32> to vector<1x1x1xf32>
    %48 = vector.broadcast %47 : vector<1x1x1xf32> to vector<2x8x128xf32>
    %49 = arith.addf %46, %48 : vector<2x8x128xf32>
    %cst_20 = arith.constant 0.000000e+00 : f32
    %50 = vector.broadcast %cst_20 : f32 to vector<2x8x128xf32>
    %51 = arith.maximumf %49, %50 : vector<2x8x128xf32>
    %52 = vector.shape_cast %51 : vector<2x8x128xf32> to vector<2x1x8x128xf32>
    %c0_21 = arith.constant 0 : index
    %c0_22 = arith.constant 0 : index
    %c0_23 = arith.constant 0 : index
    %c0_24 = arith.constant 0 : index
    %53 = vector.load %arg4[%c0_21, %c0_22, %c0_23, %c0_24] : memref<2x1x8x128xf32, #tpu.memory_space<vmem>>, vector<2x1x8x128xf32>
    tpu.vector_store %arg4[%c0_21, %c0_22, %c0_23, %c0_24], %52 {strides = array<i32>} : memref<2x1x8x128xf32, #tpu.memory_space<vmem>>, vector<2x1x8x128xf32>,
    return
  }
}

</mosaic_0001>

<llo_original>
// kernel: m2_forward.1
$region0: #{m2_forward.1}
  #allocation0 [shape = 'u32[]', space=smem, size = 0x4, offset = 0x4, fixed_abs, tag = 'smem constant byte address 0x4 - core index']
  #allocation1 [shape = 'u32[144,128]{1,0:T(1,128)}', space=vmem, size = 0x12000, scoped, tag = 'internal scratch']
  #allocation2 [shape = 'f32[1,1]{1,0:T(1,128)S(6)}', space=smem, size = 0x200, scoped, tag = 'scoped memory for m2_forward.1']
  #allocation3 [shape = 'f32[1]{0:T(128)S(6)}', space=smem, size = 0x200, scoped, tag = 'scoped memory for m2_forward.1']
  #allocation4 [shape = 'f32[1]{0:T(128)S(6)}', space=smem, size = 0x200, scoped, tag = 'scoped memory for m2_forward.1']
  %s0 = inlined_call_operand.vmem [shape: f32[2,1,8,128], index: 0, kind: input, shape index: {}]
  %s1 = inlined_call_operand.<no memory space> [shape: f32[1,1], index: 1, kind: input, shape index: {}]
  %s2 = inlined_call_operand.<no memory space> [shape: f32[1], index: 2, kind: input, shape index: {}]
  %s3 = inlined_call_operand.<no memory space> [shape: f32[1], index: 3, kind: input, shape index: {}]
  %s4 = inlined_call_operand.vmem [shape: f32[2,1,8,128], index: 4, kind: output, shape index: {}]
  %s5 = sld [smem:[#allocation0]]
  $region26: #{m2_forward.1} parent=0
    _
  %s7 = ssub.s32 1, %s5
  %s8 = scalar_select 0, %s7, %s5
  %9 = sst [smem:[#allocation2]] %s1
  %10 = sst [smem:[#allocation3]] %s2
  %11 = sst [smem:[#allocation4]] %s3
  // Predicated region
  $region2: #{m2_forward.1} parent=0 // pred_check
    _
  $region3: #{m2_forward.1} parent=0 // pred_check_branch
    %13 = sbr.rel (0) target = $region5
  $region4: #{m2_forward.1} parent=0 // pred_region
    _
  $region5: #{m2_forward.1} parent=0 // pred_fallthru
    _
  // Predicated region
  $region6: #{m2_forward.1} parent=0 // pred_check
    _
  $region7: #{m2_forward.1} parent=0 // pred_check_branch
    %15 = sbr.rel (0) target = $region9
  $region8: #{m2_forward.1} parent=0 // pred_region
    _
  $region9: #{m2_forward.1} parent=0 // pred_fallthru
    _
  // Predicated region
  $region10: #{m2_forward.1} parent=0 // pred_check
    _
  $region11: #{m2_forward.1} parent=0 // pred_check_branch
    %17 = sbr.rel (0) target = $region13
  $region12: #{m2_forward.1} parent=0 // pred_region
    _
  $region13: #{m2_forward.1} parent=0 // pred_fallthru
    _
  // Predicated region
  $region14: #{m2_forward.1} parent=0 // pred_check
    _
  $region15: #{m2_forward.1} parent=0 // pred_check_branch
    %19 = sbr.rel (0) target = $region17
  $region16: #{m2_forward.1} parent=0 // pred_region
    _
  $region17: #{m2_forward.1} parent=0 // pred_fallthru
    _
  %v20 = vld [vmem:[%s0] sm:$0xff]
  %v21 = vld [vmem:[%s0 + $0x8] sm:$0xff]
  %v22 = vadd.f32 %v20, %v21
  %23 = vadd.xlane.f32.xlu0 %v22
  %v24 = vpop.xlane.xlu0 %23
  %v25 = vrot.slane %v24, 4
  %v26 = vadd.f32 %v24, %v25
  %v27 = vrot.slane %v26, 2
  %v28 = vadd.f32 %v26, %v27
  %v29 = vrot.slane %v28, 1
  %v30 = vadd.f32 %v28, %v29
  %s31 = vtos %v30
  %v32 = vstv %s31
  %v33 = vmul.f32 %v20, %v20
  %v34 = vmul.f32 %v21, %v21
  %v35 = vadd.f32 %v33, %v34
  %36 = vadd.xlane.f32.xlu0 %v35
  %v37 = vpop.xlane.xlu0 %36
  %v38 = vrot.slane %v37, 4
  %v39 = vadd.f32 %v37, %v38
  %v40 = vrot.slane %v39, 2
  %v41 = vadd.f32 %v39, %v40
  %v42 = vrot.slane %v41, 1
  %v43 = vadd.f32 %v41, %v42
  %s44 = vtos %v43
  %v45 = vstv %s44
  %s46 = sld [smem:[#allocation2]]
  %v47 = vstv %s46
  %v48 = vmul.f32 %v47, %v32
  %s49 = smul.f32 %s46, %s46
  %v50 = vstv %s49
  %v51 = vmul.f32 %v50, %v45
  %v52 = vmul.f32 %v48, 0.013888889
  %v53 = vmul.f32 %v51, 0.013888889
  %v54 = vmul.f32 %v52, %v52
  %v55 = vsub.f32 %v53, %v54
  %v56 = vmax.f32 %v55, 0.0
  %s57 = sld [smem:[#allocation3]]
  %v58 = vadd.f32 %v56, 1e-05
  %v59 = vrsqrt.pop %v58
  %v60 = vstv %s57
  %v61 = vmul.f32 %v60, %v59
  %s62 = sld [smem:[#allocation4]]
  %v63 = vmul.f32 %v52, %v61
  %v64 = vstv %s62
  %v65 = vsub.f32 %v64, %v63
  %v66 = vmul.f32 %v47, %v61
  %v67 = vmul.f32 %v66, %v20
  %v68 = vmul.f32 %v66, %v21
  %v69 = vadd.f32 %v67, %v65
  %v70 = vadd.f32 %v68, %v65
  %v71 = vmax.f32 %v69, 0.0
  %v72 = vmax.f32 %v70, 0.0
  %73 = vst [vmem:[%s4] sm:$0xff] %v71
  %74 = vst [vmem:[%s4 + $0x8] sm:$0xff] %v72
  // Predicated region
  $region18: #{m2_forward.1} parent=0 // pred_check
    _
  $region19: #{m2_forward.1} parent=0 // pred_check_branch
    %76 = sbr.rel (0) target = $region21
  $region20: #{m2_forward.1} parent=0 // pred_region
    _
  $region21: #{m2_forward.1} parent=0 // pred_fallthru
    _
  // Predicated region
  $region22: #{m2_forward.1} parent=0 // pred_check
    _
  $region23: #{m2_forward.1} parent=0 // pred_check_branch
    %78 = sbr.rel (0) target = $region25
  $region24: #{m2_forward.1} parent=0 // pred_region
    _
  $region25: #{m2_forward.1} parent=0 // pred_fallthru
    _

</llo_original>
